<compile_context>
chip_gen: v5e
topology: v5e:2x2
jax: 0.10.0
libtpu: 0.0.40
codegen_flags: <defaults>
</compile_context>

<pallas_src>
import functools

import jax
import jax.numpy as jnp
from jax import lax
from jax.experimental import pallas as pl
from jax.experimental.pallas import tpu as pltpu

LANES = 128
TARGET_TILE_BYTES = 4 * 1024 * 1024   # ~4 MiB per grid step (double-buffered: 8 MiB)
CHUNK_ROWS = 512                      # in-kernel cast/reduce chunk (caps f32 temporaries)


def _partial_sum_kernel(x_ref, o_ref, *, tile_rows, chunk_rows, steps_per_part,
                        valid_rows):
    c = pl.program_id(0)                      # partial-sum slot (TensorCore on v7x)
    i = pl.program_id(1)                      # sequential reduction step
    blk = c * steps_per_part + i              # global (unclamped) block index
    row0 = blk * tile_rows                    # first global row covered by this step

    @pl.when(i == 0)
    def _init():
        o_ref[...] = jnp.zeros_like(o_ref)    # resident (1, 8, 128) vreg accumulator

    offsets = list(range(0, tile_rows, chunk_rows))
    full = (blk + 1) * tile_rows <= valid_rows    # block entirely inside the data

    def _accum(masked):
        s = jnp.zeros((8, LANES), jnp.float32)
        for off in offsets:                       # static unroll; ref slices are free
            cr = min(chunk_rows, tile_rows - off)
            xc = x_ref[pl.ds(off, cr), :].astype(jnp.float32)
            if masked:
                # select (not multiply): NaN/Inf garbage in the overhang cannot leak.
                row = row0 + off + lax.broadcasted_iota(jnp.int32, xc.shape, 0)
                xc = jnp.where(row < valid_rows, xc, 0.0)
            # vreg tree-sum: leading-axis reduce = pure VALU adds, no XLU.
            s = s + xc.reshape(cr // 8, 8, LANES).sum(axis=0)
        o_ref[...] += s.reshape(1, 8, LANES)

    @pl.when(full)
    def _bulk():
        _accum(False)

    @pl.when(jnp.logical_not(full))
    def _edge():                                  # partial last block or phantom step
        _accum(True)


def _sum_pallas(slab, *, target_tile_bytes=TARGET_TILE_BYTES):
    """Sum of all elements of a (rows, 128) slab (rows a multiple of the packed tile)."""
    rows, lanes = slab.shape
    assert lanes == LANES
    itemsize = jnp.dtype(slab.dtype).itemsize
    row_align = 8 * max(1, 4 // itemsize)                 # 8 f32 / 16 bf16 / 32 int8
    target_rows = max(row_align,
                      (target_tile_bytes // (LANES * itemsize)) // row_align * row_align)
    tile_rows = min(target_rows, rows)                    # both multiples of row_align
    total_steps = -(-rows // tile_rows)
    num_parts = 2 if total_steps >= 2 else 1              # v7x: one partial per TC
    steps_per_part = -(-total_steps // num_parts)
    chunk_rows = min(CHUNK_ROWS, tile_rows)

    if num_parts * steps_per_part == total_steps:
        in_map = lambda c, i: (c * steps_per_part + i, 0)
    else:
        # Odd block count: the last step of the last part is a phantom; clamp its DMA to
        # the last real block (its contribution is fully masked in-kernel). No OOB fetch.
        last = total_steps - 1
        in_map = lambda c, i: (jnp.minimum(c * steps_per_part + i, last), 0)

    kernel = functools.partial(
        _partial_sum_kernel,
        tile_rows=tile_rows, chunk_rows=chunk_rows,
        steps_per_part=steps_per_part, valid_rows=rows)

    partials = pl.pallas_call(
        kernel,
        out_shape=jax.ShapeDtypeStruct((num_parts, 8, LANES), jnp.float32),
        grid_spec=pltpu.PrefetchScalarGridSpec(
            num_scalar_prefetch=0,
            grid=(num_parts, steps_per_part),
            in_specs=[pl.BlockSpec((tile_rows, LANES), in_map)],
            out_specs=pl.BlockSpec((1, 8, LANES), lambda c, i: (c, 0, 0)),
        ),
        compiler_params=pltpu.CompilerParams(
            dimension_semantics=("parallel", "arbitrary"),
        ),
        cost_estimate=pl.CostEstimate(
            flops=rows * LANES,
            transcendentals=0,
            bytes_accessed=rows * LANES * itemsize + num_parts * 8 * LANES * 4,
        ),
    )(slab)
    return jnp.sum(partials)      # tiny (<= 2*1024 f32) final reduce in XLA


def criterion_adv_for_g(d_out_S, adv_type="hinge", *, _tile_bytes=TARGET_TILE_BYTES):
    """JAX/Pallas equivalent of CriterionAdvForG.forward: returns -mean(d_out_S[0])."""
    if adv_type not in ("wgan-gp", "hinge"):
        raise ValueError("adv_type should be wgan-gp or hinge")
    g_out_fake = jnp.asarray(d_out_S[0])          # native dtype, no f32 copy in HBM
    n = g_out_fake.size
    flat = jnp.reshape(g_out_fake, (-1,))         # contiguous reshape: no copy

    itemsize = jnp.dtype(flat.dtype).itemsize
    row_align = 8 * max(1, 4 // itemsize)         # packed sublane tile: 8/16/32 rows
    align_elems = row_align * LANES
    n_main = (n // align_elems) * align_elems     # dtype-aligned prefix for the kernel

    total = jnp.float32(0.0)
    if n_main > 0:
        main = flat if n_main == n else flat[:n_main]
        slab = main.reshape(n_main // LANES, LANES)
        total = total + _sum_pallas(slab, target_tile_bytes=_tile_bytes)
    if n_main < n:
        # Ragged tail (< row_align*128 elements): tiny XLA reduce. Replaces the previous
        # full-tensor jnp.pad copy.
        total = total + jnp.sum(flat[n_main:].astype(jnp.float32))

    # g_loss_fake = -mean(g_out_fake)   (identical for 'wgan-gp' and 'hinge')
    return -(total / jnp.float32(n))


if __name__ == "__main__":
    key = jax.random.PRNGKey(0)
    k1, k2, k3, k4 = jax.random.split(key, 4)

    # 1) Typical small PatchGAN discriminator output: single-block f32 path.
    d_small = jax.random.normal(k1, (2, 4, 16, 16), dtype=jnp.float32)
    loss = jax.block_until_ready(criterion_adv_for_g((d_small,), adv_type="hinge"))
    ref = -jnp.mean(d_small)
    assert jnp.allclose(loss, ref, atol=1e-6), (loss, ref)

    # 2) bf16 input: in-kernel chunked cast + packed-dtype (16-row) alignment.
    d_bf16 = jax.random.normal(k2, (2, 8, 96, 96), dtype=jnp.bfloat16)
    loss2 = jax.block_until_ready(criterion_adv_for_g((d_bf16,), adv_type="wgan-gp"))
    ref2 = -jnp.mean(d_bf16.astype(jnp.float32))
    assert jnp.allclose(loss2, ref2, atol=1e-4, rtol=1e-4), (loss2, ref2)

    # 3) Multi-step + 2-way parallel split + odd block count (phantom step) + partial
    #    last block, forced with a small per-step tile budget.
    d_multi = jax.random.normal(k3, (1, 1312, 128), dtype=jnp.float32)
    loss3 = jax.block_until_ready(
        criterion_adv_for_g((d_multi,), adv_type="hinge", _tile_bytes=64 * 1024))
    ref3 = -jnp.mean(d_multi)
    assert jnp.allclose(loss3, ref3, atol=1e-5, rtol=1e-4), (loss3, ref3)

    # 4) Ragged element count (n not a multiple of 1024): kernel prefix + wrapper tail.
    d_ragged = jax.random.normal(k4, (3, 5, 41, 7), dtype=jnp.float32)   # n = 4305
    loss4 = jax.block_until_ready(criterion_adv_for_g((d_ragged,), adv_type="hinge"))
    ref4 = -jnp.mean(d_ragged)
    assert jnp.allclose(loss4, ref4, atol=1e-6), (loss4, ref4)

    print("KERNEL_OK")
</pallas_src>

<mosaic_0001>
module attributes {stable_mosaic.version = 11 : i64} {
  func.func @_partial_sum_kernel(%arg0: i32, %arg1: i32, %arg2: memref<16x128xf32, #tpu.memory_space<vmem>>, %arg3: memref<1x8x128xf32, #tpu.memory_space<vmem>>) attributes {dimension_semantics = [#tpu.dimension_semantics<parallel>, #tpu.dimension_semantics<arbitrary>], iteration_bounds = array<i64: 1, 1>, scalar_prefetch = 0 : i64, scratch_operands = 0 : i64, tpu.core_type = #tpu.core_type<tc>, window_params = [{transform_indices = @transform_0, window_bounds = array<i64: 16, 128>}, {transform_indices = @transform_1, window_bounds = array<i64: 1, 8, 128>}]} {
    %c1_i32 = arith.constant 1 : i32
    %0 = arith.muli %arg0, %c1_i32 : i32
    %1 = arith.addi %0, %arg1 : i32
    %c16_i32 = arith.constant 16 : i32
    %2 = arith.muli %1, %c16_i32 : i32
    %c0_i32 = arith.constant 0 : i32
    %3 = arith.cmpi eq, %arg1, %c0_i32 : i32
    %4 = arith.extui %3 : i1 to i32
    %c0_i32_0 = arith.constant 0 : i32
    %5 = arith.cmpi ne, %4, %c0_i32_0 : i32
    scf.if %5 {
      %cst = arith.constant 0.000000e+00 : f32
      %14 = vector.broadcast %cst : f32 to vector<1x8x128xf32>
      %c0 = arith.constant 0 : index
      %c0_6 = arith.constant 0 : index
      %c0_7 = arith.constant 0 : index
      %15 = vector.load %arg3[%c0, %c0_6, %c0_7] : memref<1x8x128xf32, #tpu.memory_space<vmem>>, vector<1x8x128xf32>
      tpu.vector_store %arg3[%c0, %c0_6, %c0_7], %14 {strides = array<i32>} : memref<1x8x128xf32, #tpu.memory_space<vmem>>, vector<1x8x128xf32>,
    } else {
    }
    %c1_i32_1 = arith.constant 1 : i32
    %6 = arith.addi %1, %c1_i32_1 : i32
    %c16_i32_2 = arith.constant 16 : i32
    %7 = arith.muli %6, %c16_i32_2 : i32
    %c16_i32_3 = arith.constant 16 : i32
    %8 = arith.cmpi sle, %7, %c16_i32_3 : i32
    %9 = arith.extui %8 : i1 to i32
    %c0_i32_4 = arith.constant 0 : i32
    %10 = arith.cmpi ne, %9, %c0_i32_4 : i32
    scf.if %10 {
      %cst = arith.constant 0.000000e+00 : f32
      %14 = vector.broadcast %cst : f32 to vector<8x128xf32>
      %c0 = arith.constant 0 : index
      %c0_6 = arith.constant 0 : index
      %15 = vector.load %arg2[%c0, %c0_6] : memref<16x128xf32, #tpu.memory_space<vmem>>, vector<16x128xf32>
      %16 = vector.shape_cast %15 : vector<16x128xf32> to vector<2x8x128xf32>
      %cst_7 = arith.constant dense<0.000000e+00> : vector<8x128xf32>
      %17 = vector.multi_reduction <add>, %16, %cst_7 [0] : vector<2x8x128xf32> to vector<8x128xf32>
      %18 = arith.addf %14, %17 : vector<8x128xf32>
      %c0_8 = arith.constant 0 : index
      %c0_9 = arith.constant 0 : index
      %c0_10 = arith.constant 0 : index
      %19 = vector.load %arg3[%c0_8, %c0_9, %c0_10] : memref<1x8x128xf32, #tpu.memory_space<vmem>>, vector<1x8x128xf32>
      %20 = vector.shape_cast %18 : vector<8x128xf32> to vector<1x8x128xf32>
      %21 = arith.addf %19, %20 : vector<1x8x128xf32>
      %c0_11 = arith.constant 0 : index
      %c0_12 = arith.constant 0 : index
      %c0_13 = arith.constant 0 : index
      %22 = vector.load %arg3[%c0_11, %c0_12, %c0_13] : memref<1x8x128xf32, #tpu.memory_space<vmem>>, vector<1x8x128xf32>
      tpu.vector_store %arg3[%c0_11, %c0_12, %c0_13], %21 {strides = array<i32>} : memref<1x8x128xf32, #tpu.memory_space<vmem>>, vector<1x8x128xf32>,
    } else {
    }
    %true = arith.constant true
    %11 = arith.xori %8, %true : i1
    %12 = arith.extui %11 : i1 to i32
    %c0_i32_5 = arith.constant 0 : i32
    %13 = arith.cmpi ne, %12, %c0_i32_5 : i32
    scf.if %13 {
      %cst = arith.constant 0.000000e+00 : f32
      %14 = vector.broadcast %cst : f32 to vector<8x128xf32>
      %c0 = arith.constant 0 : index
      %c0_6 = arith.constant 0 : index
      %15 = vector.load %arg2[%c0, %c0_6] : memref<16x128xf32, #tpu.memory_space<vmem>>, vector<16x128xf32>
      %c0_i32_7 = arith.constant 0 : i32
      %16 = arith.addi %2, %c0_i32_7 : i32
      %17 = tpu.iota {dimensions = array<i32: 0>} : vector<16x128xi32>
      %18 = vector.broadcast %16 : i32 to vector<16x128xi32>
      %19 = arith.addi %18, %17 : vector<16x128xi32>
      %c16_i32_8 = arith.constant 16 : i32
      %20 = vector.broadcast %c16_i32_8 : i32 to vector<16x128xi32>
      %21 = arith.cmpi slt, %19, %20 : vector<16x128xi32>
      %cst_9 = arith.constant 0.000000e+00 : f32
      %22 = vector.broadcast %cst_9 : f32 to vector<16x128xf32>
      %23 = arith.select %21, %15, %22 : vector<16x128xi1>, vector<16x128xf32>
      %24 = vector.shape_cast %23 : vector<16x128xf32> to vector<2x8x128xf32>
      %cst_10 = arith.constant dense<0.000000e+00> : vector<8x128xf32>
      %25 = vector.multi_reduction <add>, %24, %cst_10 [0] : vector<2x8x128xf32> to vector<8x128xf32>
      %26 = arith.addf %14, %25 : vector<8x128xf32>
      %c0_11 = arith.constant 0 : index
      %c0_12 = arith.constant 0 : index
      %c0_13 = arith.constant 0 : index
      %27 = vector.load %arg3[%c0_11, %c0_12, %c0_13] : memref<1x8x128xf32, #tpu.memory_space<vmem>>, vector<1x8x128xf32>
      %28 = vector.shape_cast %26 : vector<8x128xf32> to vector<1x8x128xf32>
      %29 = arith.addf %27, %28 : vector<1x8x128xf32>
      %c0_14 = arith.constant 0 : index
      %c0_15 = arith.constant 0 : index
      %c0_16 = arith.constant 0 : index
      %30 = vector.load %arg3[%c0_14, %c0_15, %c0_16] : memref<1x8x128xf32, #tpu.memory_space<vmem>>, vector<1x8x128xf32>
      tpu.vector_store %arg3[%c0_14, %c0_15, %c0_16], %29 {strides = array<i32>} : memref<1x8x128xf32, #tpu.memory_space<vmem>>, vector<1x8x128xf32>,
    } else {
    }
    return
  }
  func.func @transform_0(%arg0: i32, %arg1: i32) -> (i32, i32) {
    %c1_i32 = arith.constant 1 : i32
    %0 = arith.muli %arg0, %c1_i32 : i32
    %1 = arith.addi %0, %arg1 : i32
    %c0_i32 = arith.constant 0 : i32
    %c0_i32_0 = arith.constant 0 : i32
    return %1, %c0_i32 : i32, i32
  }
  func.func @transform_1(%arg0: i32, %arg1: i32) -> (i32, i32, i32) {
    %c0_i32 = arith.constant 0 : i32
    %c0_i32_0 = arith.constant 0 : i32
    %c0_i32_1 = arith.constant 0 : i32
    return %arg0, %c0_i32, %c0_i32_0 : i32, i32, i32
  }
}

</mosaic_0001>

<llo_original>
// kernel: tpu_custom_call.1
$region0: #{tpu_custom_call.1}
  #allocation0 [shape = 'u32[]', space=smem, size = 0x4, offset = 0x4, fixed_abs, tag = 'smem constant byte address 0x4 - core index']
  #allocation1 [shape = 'u32[72,128]{1,0:T(1,128)}', space=vmem, size = 0x9000, scoped, tag = 'internal scratch']
  %s0 = inlined_call_operand.hbm [shape: f32[16,128], index: 0, kind: input, shape index: {}]
  %s1 = inlined_call_operand.hbm [shape: f32[1,8,128], index: 1, kind: output, shape index: {}]
  %s2 = sld [smem:[#allocation0]]
  $region30: #{tpu_custom_call.1} parent=0
    _
  %s4 = ssub.s32 1, %s2
  %s5 = scalar_select 0, %s4, %s2
  $region1: #{tpu_custom_call.1} parent=0
    #allocation2 [shape = 'u8[8192]{0}', space=vmem, size = 0x2000, scoped, tag = 'input window, operand 0, single buffered']
    #allocation3 [shape = 's32[1]{0}', space=sflag, size = 0x4, scoped, tag = 'scoped memory for tpu_custom_call.1']
    #allocation4 [shape = 's32[1]{0}', space=sflag, size = 0x4, scoped, tag = 'scoped memory for tpu_custom_call.1']
    #allocation5 [shape = 'u8[4096]{0}', space=vmem, size = 0x1000, scoped, tag = 'output window, operand 0, single buffered']
    %6 = vsyncpa [#allocation3], 0
    %7 = vsyncpa [#allocation4], 0
    // Predicated region
    $region2: #{tpu_custom_call.1} parent=1 // pred_check
      _
    $region3: #{tpu_custom_call.1} parent=1 // pred_check_branch
      %9 = sbr.rel (0) target = $region5
    $region4: #{tpu_custom_call.1} parent=1 // pred_region
      %s10 = sadd.s32 0, 0
      %s11 = smul.u32 2, %s10
      %13 = vsyncadd [#allocation3], 0
      %s14 = smul.addr %s11, 8
      %s15 = scalar_lea.hbm %s0, %s14
      %s16 = sshll.u32 %s15, 4
      %s17 = int_to_ptr.hbm [resolvable:$true] %s16
      %s18 = sshll.u32 [#allocation2], 4
      %s19 = int_to_ptr.vmem [resolvable:$true] %s18
      %24 = dma.hbm_to_vmem [thread:$0]  %s17, 256, %s19, [#allocation3], 128, 128, 8
    $region5: #{tpu_custom_call.1} parent=1 // pred_fallthru
      _
    // Predicated region
    $region6: #{tpu_custom_call.1} parent=1 // pred_check
      _
    $region7: #{tpu_custom_call.1} parent=1 // pred_check_branch
      %26 = sbr.rel (0) target = $region9
    $region8: #{tpu_custom_call.1} parent=1 // pred_region
      %28 = dma.done [#allocation3], 256
    $region9: #{tpu_custom_call.1} parent=1 // pred_fallthru
      _
    %s29 = sadd.s32 0, 0
    %s30 = smul.u32 2, %s29
    %s31 = sadd.s32 0, 0
    %s32 = smul.u32 %s31, 16
    %p33 = scmp.eq.s32.totalorder 0, 0
    // Predicated region
    $region10: #{tpu_custom_call.1} parent=1 // pred_check
      %p34 = pneg %p33
    $region11: #{tpu_custom_call.1} parent=1 // pred_check_branch
      %36 = sbr.rel (%p34) target = $region13
    $region12: #{tpu_custom_call.1} parent=1 // pred_region
      %37 = vst [vmem:[#allocation5] sm:$0xff] 0.0
    $region13: #{tpu_custom_call.1} parent=1 // pred_fallthru
      _
    %s38 = sadd.s32 %s31, 1
    %s39 = smul.u32 %s38, 16
    %p40 = scmp.le.s32.totalorder %s39, 16
    // Predicated region
    $region14: #{tpu_custom_call.1} parent=1 // pred_check
      %p41 = pneg %p40
    $region15: #{tpu_custom_call.1} parent=1 // pred_check_branch
      %43 = sbr.rel (%p41) target = $region17
    $region16: #{tpu_custom_call.1} parent=1 // pred_region
      %v44 = vld [vmem:[#allocation2] sm:$0xff]
      %v45 = vld [vmem:[#allocation2 + $0x8] sm:$0xff]
      %v46 = vadd.f32 %v44, %v45
      %v47 = vadd.f32 %v46, 0.0
      %v48 = vld [vmem:[#allocation5] sm:$0xff]
      %v49 = vadd.f32 %v48, %v47
      %50 = vst [vmem:[#allocation5] sm:$0xff] %v49
    $region17: #{tpu_custom_call.1} parent=1 // pred_fallthru
      _
    %p51 = scmp.gt.s32.totalorder %s39, 16
    // Predicated region
    $region18: #{tpu_custom_call.1} parent=1 // pred_check
      %p52 = pneg %p51
    $region19: #{tpu_custom_call.1} parent=1 // pred_check_branch
      %54 = sbr.rel (%p52) target = $region21
    $region20: #{tpu_custom_call.1} parent=1 // pred_region
      %v55 = vld [vmem:[#allocation2] sm:$0xff]
      %v56 = vld [vmem:[#allocation2 + $0x8] sm:$0xff]
      %v57 = vlaneseq
      %v58 = vshrl.u32 %v57, 7
      %v59 = vadd.s32 %v58, 8
      %v60 = vstv %s32
      %v61 = vadd.s32 %v60, %v58
      %v62 = vadd.s32 %v60, %v59
      %vm63 = vcmp.lt.s32.totalorder %v61, 16
      %vm64 = vcmp.lt.s32.totalorder %v62, 16
      %v65 = vsel %vm63, %v55, 0.0
      %v66 = vsel %vm64, %v56, 0.0
      %v67 = vadd.f32 %v65, %v66
      %v68 = vadd.f32 %v67, 0.0
      %v69 = vld [vmem:[#allocation5] sm:$0xff]
      %v70 = vadd.f32 %v69, %v68
      %71 = vst [vmem:[#allocation5] sm:$0xff] %v70
    $region21: #{tpu_custom_call.1} parent=1 // pred_fallthru
      _
    // Predicated region
    $region22: #{tpu_custom_call.1} parent=1 // pred_check
      _
    $region23: #{tpu_custom_call.1} parent=1 // pred_check_branch
      %73 = sbr.rel (0) target = $region25
    $region24: #{tpu_custom_call.1} parent=1 // pred_region
      %75 = vsyncadd [#allocation4], 0
      %s77 = sshll.u32 [#allocation5], 4
      %s78 = int_to_ptr.vmem [resolvable:$true] %s77
      %s79 = sshll.u32 %s1, 4
      %s80 = int_to_ptr.hbm [resolvable:$true] %s79
      %82 = dma.vmem_to_hbm [thread:$0]  %s78, 128, %s80, [#allocation4]
    $region25: #{tpu_custom_call.1} parent=1 // pred_fallthru
      _
    // Predicated region
    $region26: #{tpu_custom_call.1} parent=1 // pred_check
      _
    $region27: #{tpu_custom_call.1} parent=1 // pred_check_branch
      %84 = sbr.rel (0) target = $region29
    $region28: #{tpu_custom_call.1} parent=1 // pred_region
      %86 = dma.done [#allocation4], 128
    $region29: #{tpu_custom_call.1} parent=1 // pred_fallthru
      _
    %87 = vsyncpa [#allocation3], 1
    %88 = vsyncpa [#allocation4], 1

</llo_original>
